<compile_context>
chip_gen: v5e
topology: v5e:2x2
jax: 0.10.0
libtpu: 0.0.40
codegen_flags: <defaults>
</compile_context>

<pallas_src>
import functools

import jax
import jax.numpy as jnp
from jax.experimental import pallas as pl
from jax.experimental.pallas import tpu as pltpu


def _triplet_kernel(margin, a_ref, p_ref, n_ref, o_ref):
    a = a_ref[...].astype(jnp.float32)
    p = p_ref[...].astype(jnp.float32)
    n = n_ref[...].astype(jnp.float32)

    dp = a - p
    dn = a - n
    # Fused: (a-p)^2 - (a-n)^2, one cross-lane reduction, keepdims -> (TB, 1).
    delta = dp * dp - dn * dn
    row = jnp.sum(delta, axis=1, keepdims=True)

    # Per-sample hinge loss; mean is taken in the wrapper.
    o_ref[...] = jnp.maximum(row + margin, 0.0)


def _pick_block_rows(B, D):
    """~2 MiB f32 tile per input, multiple of 8, capped at B."""
    target_bytes = 2 * 1024 * 1024
    tb = target_bytes // (D * 4)
    if tb >= B:
        return B                     # full-extent block is always legal
    tb = max(8, (tb // 8) * 8)       # (8, 128) sublane constraint
    return min(tb, B)


def triplet_loss(anchor, positive, negative, target=None, *, margin=1.0,
                 block_rows=None):
    # `target` is unused by the reference forward pass; kept for API parity.
    del target
    B, D = anchor.shape
    tb = _pick_block_rows(B, D) if block_rows is None else block_rows
    grid = (pl.cdiv(B, tb),)

    kernel = functools.partial(_triplet_kernel, float(margin))
    losses = pl.pallas_call(
        kernel,
        out_shape=jax.ShapeDtypeStruct((B, 1), jnp.float32),
        grid_spec=pltpu.PrefetchScalarGridSpec(
            num_scalar_prefetch=0,
            grid=grid,
            in_specs=[
                pl.BlockSpec((tb, D), lambda i: (i, 0)),
                pl.BlockSpec((tb, D), lambda i: (i, 0)),
                pl.BlockSpec((tb, D), lambda i: (i, 0)),
            ],
            out_specs=pl.BlockSpec((tb, 1), lambda i: (i, 0)),
        ),
        compiler_params=pltpu.CompilerParams(
            dimension_semantics=("parallel",),
            vmem_limit_bytes=32 * 1024 * 1024,
        ),
    )(anchor, positive, negative)

    # Exact mean over the batch (sum once, divide by true B).
    return jnp.sum(losses) / jnp.float32(B)


def _reference(anchor, positive, negative, margin):
    dp = jnp.sum((anchor - positive) ** 2, axis=1)
    dn = jnp.sum((anchor - negative) ** 2, axis=1)
    return jnp.mean(jnp.maximum(dp - dn + margin, 0.0))


if __name__ == "__main__":
    key = jax.random.PRNGKey(0)

    # Small case matching the module's implied (batch, feature) layout.
    B, D = 8, 32
    ka, kp, kn = jax.random.split(key, 3)
    anchor = jax.random.normal(ka, (B, D), dtype=jnp.float32)
    positive = jax.random.normal(kp, (B, D), dtype=jnp.float32)
    negative = jax.random.normal(kn, (B, D), dtype=jnp.float32)
    target = jnp.zeros((B,), dtype=jnp.int32)  # unused, matches signature

    loss = triplet_loss(anchor, positive, negative, target, margin=1.0)
    jax.block_until_ready(loss)
    ref = _reference(anchor, positive, negative, 1.0)
    assert jnp.allclose(loss, ref, rtol=1e-5, atol=1e-5), (loss, ref)

    # Second check: exercises batch tiling + ragged last tile (200 = 3*64 + 8).
    B2, D2 = 200, 128
    k2 = jax.random.split(jax.random.PRNGKey(1), 3)
    a2 = jax.random.normal(k2[0], (B2, D2), dtype=jnp.float32)
    p2 = jax.random.normal(k2[1], (B2, D2), dtype=jnp.float32)
    n2 = jax.random.normal(k2[2], (B2, D2), dtype=jnp.float32)
    loss2 = triplet_loss(a2, p2, n2, margin=0.5, block_rows=64)
    jax.block_until_ready(loss2)
    ref2 = _reference(a2, p2, n2, 0.5)
    assert jnp.allclose(loss2, ref2, rtol=1e-5, atol=1e-5), (loss2, ref2)

    print("KERNEL_OK")
</pallas_src>

<mosaic_0001>
module attributes {stable_mosaic.version = 11 : i64} {
  func.func @_triplet_kernel(%arg0: i32, %arg1: memref<8x32xf32, #tpu.memory_space<vmem>>, %arg2: memref<8x32xf32, #tpu.memory_space<vmem>>, %arg3: memref<8x32xf32, #tpu.memory_space<vmem>>, %arg4: memref<8x1xf32, #tpu.memory_space<vmem>>) attributes {dimension_semantics = [#tpu.dimension_semantics<parallel>], iteration_bounds = array<i64: 1>, scalar_prefetch = 0 : i64, scratch_operands = 0 : i64, tpu.core_type = #tpu.core_type<tc>, window_params = [{transform_indices = @transform_0, window_bounds = array<i64: 8, 32>}, {transform_indices = @transform_1, window_bounds = array<i64: 8, 32>}, {transform_indices = @transform_2, window_bounds = array<i64: 8, 32>}, {transform_indices = @transform_3, window_bounds = array<i64: 8, 1>}]} {
    %c0 = arith.constant 0 : index
    %c0_0 = arith.constant 0 : index
    %0 = vector.load %arg1[%c0, %c0_0] : memref<8x32xf32, #tpu.memory_space<vmem>>, vector<8x32xf32>
    %c0_1 = arith.constant 0 : index
    %c0_2 = arith.constant 0 : index
    %1 = vector.load %arg2[%c0_1, %c0_2] : memref<8x32xf32, #tpu.memory_space<vmem>>, vector<8x32xf32>
    %c0_3 = arith.constant 0 : index
    %c0_4 = arith.constant 0 : index
    %2 = vector.load %arg3[%c0_3, %c0_4] : memref<8x32xf32, #tpu.memory_space<vmem>>, vector<8x32xf32>
    %3 = arith.subf %0, %1 : vector<8x32xf32>
    %4 = arith.subf %0, %2 : vector<8x32xf32>
    %5 = arith.mulf %3, %3 : vector<8x32xf32>
    %6 = arith.mulf %4, %4 : vector<8x32xf32>
    %7 = arith.subf %5, %6 : vector<8x32xf32>
    %cst = arith.constant dense<0.000000e+00> : vector<8xf32>
    %8 = vector.multi_reduction <add>, %7, %cst [1] : vector<8x32xf32> to vector<8xf32>
    %9 = vector.shape_cast %8 : vector<8xf32> to vector<8x1xf32>
    %cst_5 = arith.constant 1.000000e+00 : f32
    %10 = vector.broadcast %cst_5 : f32 to vector<8x1xf32>
    %11 = arith.addf %9, %10 : vector<8x1xf32>
    %cst_6 = arith.constant 0.000000e+00 : f32
    %12 = vector.broadcast %cst_6 : f32 to vector<8x1xf32>
    %13 = arith.maximumf %11, %12 : vector<8x1xf32>
    %c0_7 = arith.constant 0 : index
    %c0_8 = arith.constant 0 : index
    %14 = vector.load %arg4[%c0_7, %c0_8] : memref<8x1xf32, #tpu.memory_space<vmem>>, vector<8x1xf32>
    tpu.vector_store %arg4[%c0_7, %c0_8], %13 {strides = array<i32>} : memref<8x1xf32, #tpu.memory_space<vmem>>, vector<8x1xf32>,
    return
  }
  func.func @transform_0(%arg0: i32) -> (i32, i32) {
    %c0_i32 = arith.constant 0 : i32
    %c0_i32_0 = arith.constant 0 : i32
    return %arg0, %c0_i32 : i32, i32
  }
  func.func @transform_1(%arg0: i32) -> (i32, i32) {
    %c0_i32 = arith.constant 0 : i32
    %c0_i32_0 = arith.constant 0 : i32
    return %arg0, %c0_i32 : i32, i32
  }
  func.func @transform_2(%arg0: i32) -> (i32, i32) {
    %c0_i32 = arith.constant 0 : i32
    %c0_i32_0 = arith.constant 0 : i32
    return %arg0, %c0_i32 : i32, i32
  }
  func.func @transform_3(%arg0: i32) -> (i32, i32) {
    %c0_i32 = arith.constant 0 : i32
    %c0_i32_0 = arith.constant 0 : i32
    return %arg0, %c0_i32 : i32, i32
  }
}

</mosaic_0001>

<llo_original>
// kernel: tpu_custom_call.1
$region0: #{tpu_custom_call.1}
  #allocation0 [shape = 'u32[]', space=smem, size = 0x4, offset = 0x4, fixed_abs, tag = 'smem constant byte address 0x4 - core index']
  #allocation1 [shape = 'u32[72,128]{1,0:T(1,128)}', space=vmem, size = 0x9000, scoped, tag = 'internal scratch']
  %s0 = inlined_call_operand.hbm [shape: f32[8,32], index: 0, kind: input, shape index: {}]
  %s1 = inlined_call_operand.hbm [shape: f32[8,32], index: 1, kind: input, shape index: {}]
  %s2 = inlined_call_operand.hbm [shape: f32[8,32], index: 2, kind: input, shape index: {}]
  %s3 = inlined_call_operand.vmem [shape: f32[8,1], index: 3, kind: output, shape index: {}]
  %s4 = sld [smem:[#allocation0]]
  $region34: #{tpu_custom_call.1} parent=0
    _
  %s6 = ssub.s32 1, %s4
  %s7 = scalar_select 0, %s6, %s4
  $region1: #{tpu_custom_call.1} parent=0
    #allocation2 [shape = 'u8[4096]{0}', space=vmem, size = 0x1000, scoped, tag = 'input window, operand 0, single buffered']
    #allocation3 [shape = 's32[1]{0}', space=sflag, size = 0x4, scoped, tag = 'scoped memory for tpu_custom_call.1']
    #allocation4 [shape = 'u8[4096]{0}', space=vmem, size = 0x1000, scoped, tag = 'input window, operand 1, single buffered']
    #allocation5 [shape = 's32[1]{0}', space=sflag, size = 0x4, scoped, tag = 'scoped memory for tpu_custom_call.1']
    #allocation6 [shape = 'u8[4096]{0}', space=vmem, size = 0x1000, scoped, tag = 'input window, operand 2, single buffered']
    %8 = vsyncpa [#allocation3], 0
    %9 = vsyncpa [#allocation5], 0
    // Predicated region
    $region2: #{tpu_custom_call.1} parent=1 // pred_check
      _
    $region3: #{tpu_custom_call.1} parent=1 // pred_check_branch
      %11 = sbr.rel (0) target = $region5
    $region4: #{tpu_custom_call.1} parent=1 // pred_region
      %13 = vsyncadd [#allocation3], 0
      %s15 = sshll.u32 %s0, 4
      %s16 = int_to_ptr.hbm [resolvable:$true] %s15
      %s17 = sshll.u32 [#allocation2], 4
      %s18 = int_to_ptr.vmem [resolvable:$true] %s17
      %20 = dma.hbm_to_vmem [thread:$0]  %s16, 128, %s18, [#allocation3]
    $region5: #{tpu_custom_call.1} parent=1 // pred_fallthru
      _
    // Predicated region
    $region6: #{tpu_custom_call.1} parent=1 // pred_check
      _
    $region7: #{tpu_custom_call.1} parent=1 // pred_check_branch
      %22 = sbr.rel (0) target = $region9
    $region8: #{tpu_custom_call.1} parent=1 // pred_region
      %24 = vsyncadd [#allocation5], 0
      %s26 = sshll.u32 %s1, 4
      %s27 = int_to_ptr.hbm [resolvable:$true] %s26
      %s28 = sshll.u32 [#allocation4], 4
      %s29 = int_to_ptr.vmem [resolvable:$true] %s28
      %31 = dma.hbm_to_vmem [thread:$0]  %s27, 128, %s29, [#allocation5]
    $region9: #{tpu_custom_call.1} parent=1 // pred_fallthru
      _
    // Predicated region
    $region10: #{tpu_custom_call.1} parent=1 // pred_check
      _
    $region11: #{tpu_custom_call.1} parent=1 // pred_check_branch
      %33 = sbr.rel (0) target = $region13
    $region12: #{tpu_custom_call.1} parent=1 // pred_region
      %35 = vsyncadd [#allocation5], 0
      %s37 = sshll.u32 %s2, 4
      %s38 = int_to_ptr.hbm [resolvable:$true] %s37
      %s39 = sshll.u32 [#allocation6], 4
      %s40 = int_to_ptr.vmem [resolvable:$true] %s39
      %42 = dma.hbm_to_vmem [thread:$0]  %s38, 128, %s40, [#allocation5]
    $region13: #{tpu_custom_call.1} parent=1 // pred_fallthru
      _
    // Predicated region
    $region14: #{tpu_custom_call.1} parent=1 // pred_check
      _
    $region15: #{tpu_custom_call.1} parent=1 // pred_check_branch
      %44 = sbr.rel (0) target = $region17
    $region16: #{tpu_custom_call.1} parent=1 // pred_region
      %46 = dma.done [#allocation3], 128
    $region17: #{tpu_custom_call.1} parent=1 // pred_fallthru
      _
    // Predicated region
    $region18: #{tpu_custom_call.1} parent=1 // pred_check
      _
    $region19: #{tpu_custom_call.1} parent=1 // pred_check_branch
      %48 = sbr.rel (0) target = $region21
    $region20: #{tpu_custom_call.1} parent=1 // pred_region
      %50 = dma.done [#allocation5], 128
    $region21: #{tpu_custom_call.1} parent=1 // pred_fallthru
      _
    // Predicated region
    $region22: #{tpu_custom_call.1} parent=1 // pred_check
      _
    $region23: #{tpu_custom_call.1} parent=1 // pred_check_branch
      %52 = sbr.rel (0) target = $region25
    $region24: #{tpu_custom_call.1} parent=1 // pred_region
      %54 = dma.done [#allocation5], 128
    $region25: #{tpu_custom_call.1} parent=1 // pred_fallthru
      _
    %v55 = vld [vmem:[#allocation2] sm:$0xff]
    %v56 = vld [vmem:[#allocation4] sm:$0xff]
    %v57 = vld [vmem:[#allocation6] sm:$0xff]
    %v58 = vsub.f32 %v55, %v56
    %v59 = vsub.f32 %v55, %v57
    %v60 = vmul.f32 %v58, %v58
    %v61 = vmul.f32 %v59, %v59
    %v62 = vsub.f32 %v60, %v61
    %vm63 = vcmask 261120
    %v64 = vsel %vm63, %v62, 0.0
    %65 = vadd.xlane.f32.xlu0 %v64
    %v66 = vpop.xlane.xlu0 %65
    %v67 = vadd.f32 %v66, 1.0
    %v68 = vmax.f32 %v67, 0.0
    %vm69 = vcmask 7168
    %70 = vst.msk [vmem:[%s3] sm:$0xff] %vm69, %v68
    // Predicated region
    $region26: #{tpu_custom_call.1} parent=1 // pred_check
      _
    $region27: #{tpu_custom_call.1} parent=1 // pred_check_branch
      %72 = sbr.rel (0) target = $region29
    $region28: #{tpu_custom_call.1} parent=1 // pred_region
      _
    $region29: #{tpu_custom_call.1} parent=1 // pred_fallthru
      _
    // Predicated region
    $region30: #{tpu_custom_call.1} parent=1 // pred_check
      _
    $region31: #{tpu_custom_call.1} parent=1 // pred_check_branch
      %74 = sbr.rel (0) target = $region33
    $region32: #{tpu_custom_call.1} parent=1 // pred_region
      _
    $region33: #{tpu_custom_call.1} parent=1 // pred_fallthru
      _
    %75 = vsyncpa [#allocation3], 1
    %76 = vsyncpa [#allocation5], 1

</llo_original>
